<compile_context>
chip_gen: v5e
topology: v5e:2x2
jax: 0.10.0
libtpu: 0.0.40
codegen_flags: <defaults>
</compile_context>

<pallas_src>
import math

import jax
import jax.numpy as jnp
from jax.experimental import pallas as pl
from jax.experimental.pallas import tpu as pltpu


def _sinpos_kernel(x_ref, freq_ref, phase_ref, o_ref):
    # x_ref:     (TR, 1) or (TR, W)  float32
    # freq_ref:  (1, W)              float32   (scale already folded in)
    # phase_ref: (1, W)              float32   (0 for sin lanes, pi/2 for cos lanes)
    # o_ref:     (TR, W)             out dtype
    arg = x_ref[...] * freq_ref[...] + phase_ref[...]      # VPU broadcast mul/add
    o_ref[...] = jnp.sin(arg).astype(o_ref.dtype)          # one vectorized sin, full-width store


def _round_up(n, m):
    return ((n + m - 1) // m) * m


def _cdiv(a, b):
    return (a + b - 1) // b


def sinusoidal_pos_emb(x, dim, scale=1000.0, out_dtype=jnp.float32):
    """x: (B,) float array -> (B, dim) embedding (dtype = out_dtype)."""
    assert dim % 2 == 0, "dim must be even (dim//2 halves for sin/cos)"
    assert dim >= 4, "dim >= 4 required (half_dim - 1 > 0 in freq computation)"
    half = dim // 2
    B = int(x.shape[0])
    itemsize = jnp.dtype(out_dtype).itemsize

    # ---- host-side constant tables (scale folded in; cos(t) == sin(t + pi/2)) ----
    emb_scale = math.log(10000.0) / (half - 1)
    freq = jnp.exp(jnp.arange(half, dtype=jnp.float32) * jnp.float32(-emb_scale))
    freq_full = jnp.concatenate([freq, freq]) * jnp.float32(scale)            # (dim,)
    phase_full = jnp.concatenate(
        [jnp.zeros((half,), jnp.float32),
         jnp.full((half,), jnp.float32(math.pi / 2))])                        # (dim,)

    # ---- lane-dense packing: r batch rows per 128-lane output row when dim < 128 ----
    r = (128 // dim) if (dim < 128 and 128 % dim == 0) else 1
    width = dim * r
    freq_lane = jnp.tile(freq_full, (r,)).reshape(1, width)
    phase_lane = jnp.tile(phase_full, (r,)).reshape(1, width)

    rows = _cdiv(B, r)                       # packed output rows needed

    # ---- dim-aware tiling: ~2 MiB per output tile; >= 2 grid steps when there is
    # enough work so both v7x TensorCores get a share of the "parallel" axis. ----
    target_rows = max(8, min(4096, ((2 << 20) // (width * itemsize)) // 8 * 8))
    tile_rows = min(target_rows, _round_up(rows, 8))
    if rows > 256 and tile_rows >= rows:
        tile_rows = max(8, _round_up(_cdiv(rows, 2), 8))
    rows_pad = _round_up(rows, tile_rows)
    grid = (rows_pad // tile_rows,)

    # ---- pack x (padded rows compute sin(phase) and are sliced off at the end) ----
    xf = x.astype(jnp.float32).reshape(-1)
    xf = jnp.pad(xf, (0, rows_pad * r - B))
    if r == 1:
        xp = xf.reshape(rows_pad, 1)                                          # lane-broadcast in kernel
        x_block = (tile_rows, 1)
    else:
        # Repeat each timestep across its dim lanes -> purely elementwise kernel,
        # lane-dense unmasked stores.
        xp = jnp.broadcast_to(
            xf.reshape(rows_pad, r, 1), (rows_pad, r, dim)).reshape(rows_pad, width)
        x_block = (tile_rows, width)

    cost = pl.CostEstimate(
        flops=2 * rows_pad * width,               # one mul + one add per element
        transcendentals=rows_pad * width,         # one sin per element
        bytes_accessed=int(xp.size) * 4
        + rows_pad * width * itemsize
        + 2 * width * 4,
    )

    out = pl.pallas_call(
        _sinpos_kernel,
        out_shape=jax.ShapeDtypeStruct((rows_pad, width), out_dtype),
        grid=grid,
        in_specs=[
            pl.BlockSpec(x_block, lambda i: (i, 0)),           # x tile per grid step
            pl.BlockSpec((1, width), lambda i: (0, 0)),        # freq (resident)
            pl.BlockSpec((1, width), lambda i: (0, 0)),        # phase (resident)
        ],
        out_specs=pl.BlockSpec((tile_rows, width), lambda i: (i, 0)),
        compiler_params=pltpu.CompilerParams(
            dimension_semantics=("parallel",),
        ),
        cost_estimate=cost,
    )(xp, freq_lane, phase_lane)

    # (rows_pad, r*dim) row-major == (rows_pad*r, dim) row-major; drop padding.
    return out.reshape(rows_pad * r, dim)[:B]


def _reference(x, dim, scale=1000.0):
    half = dim // 2
    emb_scale = math.log(10000.0) / (half - 1)
    freq = jnp.exp(jnp.arange(half, dtype=jnp.float32) * -emb_scale)
    arg = scale * x.astype(jnp.float32)[:, None] * freq[None, :]
    return jnp.concatenate([jnp.sin(arg), jnp.cos(arg)], axis=-1)


if __name__ == "__main__":
    key = jax.random.PRNGKey(0)

    # GradTTS default-ish: dim=64 (exercises the lane-dense packed path, r=2).
    B, dim = 8, 64
    x = jax.random.uniform(key, (B,), dtype=jnp.float32)   # diffusion timesteps in (0,1)
    out = jax.block_until_ready(sinusoidal_pos_emb(x, dim, scale=1000.0))
    ref = _reference(x, dim, scale=1000.0)
    assert out.shape == (B, dim), out.shape
    # atol reflects f32 range reduction at |arg| ~ 1e3 (scale=1000) and the
    # scale-folding / sin(t+pi/2) reassociation vs the torch-ordered reference.
    assert jnp.allclose(out, ref, atol=2e-3, rtol=0.0), "mismatch vs reference (dim=64)"

    # Wide path (dim >= 128, r=1) with ragged batch to exercise padding/slicing.
    B2, dim2 = 10, 256
    x2 = jax.random.uniform(jax.random.PRNGKey(1), (B2,), dtype=jnp.float32)
    out2 = jax.block_until_ready(sinusoidal_pos_emb(x2, dim2, scale=1000.0))
    ref2 = _reference(x2, dim2, scale=1000.0)
    assert out2.shape == (B2, dim2), out2.shape
    assert jnp.allclose(out2, ref2, atol=2e-3, rtol=0.0), "mismatch vs reference (dim=256)"

    print("KERNEL_OK")
</pallas_src>

<mosaic_0001>
module attributes {stable_mosaic.version = 11 : i64} {
  func.func @_sinpos_kernel(%arg0: i32, %arg1: memref<8x128xf32, #tpu.memory_space<vmem>>, %arg2: memref<1x128xf32, #tpu.memory_space<vmem>>, %arg3: memref<1x128xf32, #tpu.memory_space<vmem>>, %arg4: memref<8x128xf32, #tpu.memory_space<vmem>>) attributes {dimension_semantics = [#tpu.dimension_semantics<parallel>], iteration_bounds = array<i64: 1>, scalar_prefetch = 0 : i64, scratch_operands = 0 : i64, tpu.core_type = #tpu.core_type<tc>, window_params = [{transform_indices = @transform_0, window_bounds = array<i64: 8, 128>}, {pipeline_mode = #tpu.pipeline_mode<synchronous>, transform_indices = @transform_1, window_bounds = array<i64: 1, 128>}, {pipeline_mode = #tpu.pipeline_mode<synchronous>, transform_indices = @transform_2, window_bounds = array<i64: 1, 128>}, {transform_indices = @transform_3, window_bounds = array<i64: 8, 128>}]} {
    %c0 = arith.constant 0 : index
    %c0_0 = arith.constant 0 : index
    %0 = vector.load %arg1[%c0, %c0_0] : memref<8x128xf32, #tpu.memory_space<vmem>>, vector<8x128xf32>
    %c0_1 = arith.constant 0 : index
    %c0_2 = arith.constant 0 : index
    %1 = vector.load %arg2[%c0_1, %c0_2] : memref<1x128xf32, #tpu.memory_space<vmem>>, vector<1x128xf32>
    %2 = vector.broadcast %1 : vector<1x128xf32> to vector<8x128xf32>
    %3 = arith.mulf %0, %2 : vector<8x128xf32>
    %c0_3 = arith.constant 0 : index
    %c0_4 = arith.constant 0 : index
    %4 = vector.load %arg3[%c0_3, %c0_4] : memref<1x128xf32, #tpu.memory_space<vmem>>, vector<1x128xf32>
    %5 = vector.broadcast %4 : vector<1x128xf32> to vector<8x128xf32>
    %6 = arith.addf %3, %5 : vector<8x128xf32>
    %7 = math.sin %6 : vector<8x128xf32>
    %c0_5 = arith.constant 0 : index
    %c0_6 = arith.constant 0 : index
    %8 = vector.load %arg4[%c0_5, %c0_6] : memref<8x128xf32, #tpu.memory_space<vmem>>, vector<8x128xf32>
    tpu.vector_store %arg4[%c0_5, %c0_6], %7 {strides = array<i32>} : memref<8x128xf32, #tpu.memory_space<vmem>>, vector<8x128xf32>,
    return
  }
  func.func @transform_0(%arg0: i32) -> (i32, i32) {
    %c0_i32 = arith.constant 0 : i32
    %c0_i32_0 = arith.constant 0 : i32
    return %arg0, %c0_i32 : i32, i32
  }
  func.func @transform_1(%arg0: i32) -> (i32, i32) {
    %c0_i32 = arith.constant 0 : i32
    %c0_i32_0 = arith.constant 0 : i32
    %c0_i32_1 = arith.constant 0 : i32
    return %c0_i32, %c0_i32_0 : i32, i32
  }
  func.func @transform_2(%arg0: i32) -> (i32, i32) {
    %c0_i32 = arith.constant 0 : i32
    %c0_i32_0 = arith.constant 0 : i32
    %c0_i32_1 = arith.constant 0 : i32
    return %c0_i32, %c0_i32_0 : i32, i32
  }
  func.func @transform_3(%arg0: i32) -> (i32, i32) {
    %c0_i32 = arith.constant 0 : i32
    %c0_i32_0 = arith.constant 0 : i32
    return %arg0, %c0_i32 : i32, i32
  }
}

</mosaic_0001>

<llo_original>
// kernel: tpu_custom_call.1
$region0: #{tpu_custom_call.1}
  #allocation0 [shape = 'u32[]', space=smem, size = 0x4, offset = 0x4, fixed_abs, tag = 'smem constant byte address 0x4 - core index']
  #allocation1 [shape = 'u32[72,128]{1,0:T(1,128)}', space=vmem, size = 0x9000, scoped, tag = 'internal scratch']
  %s0 = inlined_call_operand.hbm [shape: f32[8,128], index: 0, kind: input, shape index: {}]
  %s1 = inlined_call_operand.hbm [shape: f32[1,128], index: 1, kind: input, shape index: {}]
  %s2 = inlined_call_operand.vmem [shape: f32[1,128], index: 2, kind: input, shape index: {}]
  %s3 = inlined_call_operand.hbm [shape: f32[8,128], index: 3, kind: output, shape index: {}]
  %s4 = sld [smem:[#allocation0]]
  $region30: #{tpu_custom_call.1} parent=0
    _
  %s6 = ssub.s32 1, %s4
  %s7 = scalar_select 0, %s6, %s4
  $region1: #{tpu_custom_call.1} parent=0
    #allocation2 [shape = 'u8[4096]{0}', space=vmem, size = 0x1000, scoped, tag = 'input window, operand 0, single buffered']
    #allocation3 [shape = 's32[1]{0}', space=sflag, size = 0x4, scoped, tag = 'scoped memory for tpu_custom_call.1']
    #allocation4 [shape = 's32[1]{0}', space=sflag, size = 0x4, scoped, tag = 'scoped memory for tpu_custom_call.1']
    #allocation5 [shape = 'u8[512]{0}', space=vmem, size = 0x400, scoped, tag = 'input window, operand 1, single buffered']
    #allocation6 [shape = 's32[1]{0}', space=sflag, size = 0x4, scoped, tag = 'scoped memory for tpu_custom_call.1']
    #allocation7 [shape = 'u8[4096]{0}', space=vmem, size = 0x1000, scoped, tag = 'output window, operand 0, single buffered']
    %8 = vsyncpa [#allocation3], 0
    %9 = vsyncpa [#allocation6], 0
    %10 = vsyncpa [#allocation4], 0
    // Predicated region
    $region2: #{tpu_custom_call.1} parent=1 // pred_check
      _
    $region3: #{tpu_custom_call.1} parent=1 // pred_check_branch
      %12 = sbr.rel (0) target = $region5
    $region4: #{tpu_custom_call.1} parent=1 // pred_region
      %14 = vsyncadd [#allocation3], 0
      %s16 = sshll.u32 %s0, 4
      %s17 = int_to_ptr.hbm [resolvable:$true] %s16
      %s18 = sshll.u32 [#allocation2], 4
      %s19 = int_to_ptr.vmem [resolvable:$true] %s18
      %21 = dma.hbm_to_vmem [thread:$0]  %s17, 128, %s19, [#allocation3]
    $region5: #{tpu_custom_call.1} parent=1 // pred_fallthru
      _
    // Predicated region
    $region6: #{tpu_custom_call.1} parent=1 // pred_check
      _
    $region7: #{tpu_custom_call.1} parent=1 // pred_check_branch
      %23 = sbr.rel (0) target = $region9
    $region8: #{tpu_custom_call.1} parent=1 // pred_region
      %25 = vsyncadd [#allocation6], 0
      %s27 = sshll.u32 %s1, 4
      %s28 = int_to_ptr.hbm [resolvable:$true] %s27
      %s29 = sshll.u32 [#allocation5], 4
      %s30 = int_to_ptr.vmem [resolvable:$true] %s29
      %32 = dma.hbm_to_vmem [thread:$0]  %s28, 16, %s30, [#allocation6]
    $region9: #{tpu_custom_call.1} parent=1 // pred_fallthru
      _
    // Predicated region
    $region10: #{tpu_custom_call.1} parent=1 // pred_check
      _
    $region11: #{tpu_custom_call.1} parent=1 // pred_check_branch
      %34 = sbr.rel (0) target = $region13
    $region12: #{tpu_custom_call.1} parent=1 // pred_region
      _
    $region13: #{tpu_custom_call.1} parent=1 // pred_fallthru
      _
    // Predicated region
    $region14: #{tpu_custom_call.1} parent=1 // pred_check
      _
    $region15: #{tpu_custom_call.1} parent=1 // pred_check_branch
      %36 = sbr.rel (0) target = $region17
    $region16: #{tpu_custom_call.1} parent=1 // pred_region
      %38 = dma.done [#allocation3], 128
    $region17: #{tpu_custom_call.1} parent=1 // pred_fallthru
      _
    // Predicated region
    $region18: #{tpu_custom_call.1} parent=1 // pred_check
      _
    $region19: #{tpu_custom_call.1} parent=1 // pred_check_branch
      %40 = sbr.rel (0) target = $region21
    $region20: #{tpu_custom_call.1} parent=1 // pred_region
      %42 = dma.done [#allocation6], 16
    $region21: #{tpu_custom_call.1} parent=1 // pred_fallthru
      _
    %v43 = vld [vmem:[#allocation2] sm:$0xff]
    %v44 = vld [vmem:[#allocation5] sm:$0x1]
    %v46 = vperm.slane %v44, 0
    %v48 = vmul.f32 %v43, %v46
    %v49 = vld [vmem:[%s2] sm:$0x1]
    %v51 = vperm.slane %v49, 0
    %v53 = vadd.f32 %v48, %v51
    %v54 = vand.u32 2147483647, %v53
    %vm55 = vcmp.le.f32.partialorder %v54, 0.7853982
    %vm56 = vcmp.lt.s32.totalorder %v53, 0
    %v57 = vand.u32 %v53, 2139095040
    %v58 = vshrl.u32 %v57, 23
    %v59 = vsub.s32 %v58, 127
    %v60 = vand.u32 2147483647, %v53
    %v61 = vand.u32 %v60, 8388607
    %v62 = vor.u32 %v61, 8388608
    %v63 = vsub.s32 0, %v62
    %v64 = vadd.s32 %v59, 1
    %vm65 = vcmp.gt.s32.totalorder %v64, 0
    %v66 = vsel %vm65, %v64, 0
    %v67 = vshrl.u32 %v66, 5
    %v68 = vand.u32 %v66, 31
    %v69 = vsub.s32 32, %v68
    %v70 = vshrl.u32 683565275, %v69
    %v71 = vshll.u32 683565275, %v68
    %v72 = vshrl.u32 2475754826, %v69
    %v73 = vor.u32 %v71, %v72
    %v74 = vshll.u32 2475754826, %v68
    %v75 = vshrl.u32 2131351028, %v69
    %v76 = vor.u32 %v74, %v75
    %v77 = vshll.u32 2131351028, %v68
    %v78 = vshrl.u32 2102212464, %v69
    %v79 = vor.u32 %v77, %v78
    %v80 = vshll.u32 2102212464, %v68
    %v81 = vshrl.u32 920167782, %v69
    %v82 = vor.u32 %v80, %v81
    %v83 = vshll.u32 920167782, %v68
    %v84 = vshrl.u32 1326507024, %v69
    %v85 = vor.u32 %v83, %v84
    %vm86 = vcmp.lt.s32.totalorder %v67, 1
    %vm87 = vcmp.lt.s32.totalorder %v67, 2
    %vm88 = vcmp.lt.s32.totalorder %v67, 3
    %vm89 = vcmp.lt.s32.totalorder %v67, 4
    %v90 = vsel %vm86, %v70, %v73
    %v91 = vsel %vm89, %v79, 2102212464
    %v92 = vsel %vm88, %v76, %v91
    %v93 = vsel %vm87, %v90, %v92
    %v94 = vsel %vm86, %v73, %v76
    %v95 = vsel %vm89, %v82, 920167782
    %v96 = vsel %vm88, %v79, %v95
    %v97 = vsel %vm87, %v94, %v96
    %v98 = vsel %vm86, %v76, %v79
    %v99 = vsel %vm89, %v85, 1326507024
    %v100 = vsel %vm88, %v82, %v99
    %v101 = vsel %vm87, %v98, %v100
    %v102 = vshll.u32 %v62, 8
    %v103 = vand.u32 %v102, 65535
    %v104 = vshrl.u32 %v102, 16
    %v105 = vand.u32 %v101, 65535
    %v106 = vshrl.u32 %v101, 16
    %v107 = vmul.u32 %v103, %v105
    %v108 = vmul.u32 %v103, %v106
    %v109 = vmul.u32 %v104, %v105
    %v110 = vmul.u32 %v104, %v106
    %v111 = vshll.u32 %v108, 16
    %v112 = vshrl.u32 %v108, 16
    %v113 = vshll.u32 %v109, 16
    %v114 = vshrl.u32 %v109, 16
    %vm115 = vc.u32 %v107, %v111
    %v116 = vsel %vm115, 1, 0
    %v117 = vadd.s32 %v107, %v111
    %v118 = vadd.s32 %v110, %v116
    %vm119 = vc.u32 %v117, %v113
    %v120 = vsel %vm119, 1, 0
    %v121 = vadd.s32 %v117, %v113
    %v122 = vadd.s32 %v118, %v120
    %v123 = vadd.s32 %v122, %v112
    %v124 = vadd.s32 %v123, %v114
    %v125 = vand.u32 %v102, 65535
    %v126 = vshrl.u32 %v102, 16
    %v127 = vand.u32 %v97, 65535
    %v128 = vshrl.u32 %v97, 16
    %v129 = vmul.u32 %v125, %v127
    %v130 = vmul.u32 %v125, %v128
    %v131 = vmul.u32 %v126, %v127
    %v132 = vmul.u32 %v126, %v128
    %v133 = vshll.u32 %v130, 16
    %v134 = vshrl.u32 %v130, 16
    %v135 = vshll.u32 %v131, 16
    %v136 = vshrl.u32 %v131, 16
    %vm137 = vc.u32 %v129, %v133
    %v138 = vsel %vm137, 1, 0
    %v139 = vadd.s32 %v129, %v133
    %v140 = vadd.s32 %v132, %v138
    %vm141 = vc.u32 %v139, %v135
    %v142 = vsel %vm141, 1, 0
    %v143 = vadd.s32 %v139, %v135
    %v144 = vadd.s32 %v140, %v142
    %v145 = vadd.s32 %v144, %v134
    %v146 = vadd.s32 %v145, %v136
    %v147 = vmul.u32 %v102, %v93
    %v148 = vadd.s32 %v124, %v143
    %vm149 = vc.u32 %v124, %v143
    %v150 = vadd.s32 %v146, 1
    %v151 = vsel %vm149, %v150, %v146
    %v152 = vadd.s32 %v147, %v151
    %v153 = vadd.s32 %v152, 536870912
    %v154 = vshrl.u32 %v153, 30
    %v155 = vshll.u32 %v154, 30
    %v156 = vsub.s32 %v152, %v155
    %vm157 = vcmp.lt.s32.totalorder %v156, 0
    %v158 = vsub.s32 0, %v156
    %v159 = vsel %vm157, %v158, %v156
    %v160 = vclz %v159
    %v161 = vsub.s32 %v160, 2
    %vm162 = vcmp.gt.s32.totalorder 0, %v161
    %v163 = vsel %vm162, 0, %v161
    %v164 = vsub.s32 32, %v163
    %v165 = vshll.u32 %v156, %v163
    %v166 = vshrl.u32 %v148, %v164
    %v167 = vor.u32 %v165, %v166
    %v168 = vsub.s32 4294967266, %v163
    %v169 = vadd.s32 %v168, 127
    %v170 = vshll.u32 %v169, 23
    %v171 = vor.u32 4788187, %v170
    %v172 = vand.u32 2147483647, %v171
    %v174 = vcvt.s32.f32 %v167
    %v175 = vmul.f32 %v174, %v172
    %v176 = vxor.u32 %v175, 2147483648
    %v177 = vsel %vm56, %v176, %v175
    %v178 = vsub.s32 4, %v154
    %v179 = vsel %vm56, %v178, %v154
    %v180 = vsel %vm55, %v53, %v177
    %v181 = vsel %vm55, 0, %v179
    %v182 = vmul.f32 %v180, %v180
    %v183 = vmul.f32 %v182, -0.001358992
    %v184 = vadd.f32 %v183, 0.041655596
    %v185 = vmul.f32 %v182, %v184
    %v186 = vadd.f32 %v185, -0.4999988
    %v187 = vmul.f32 %v182, %v186
    %v188 = vadd.f32 1.0, %v187
    %v189 = vmul.f32 %v180, %v180
    %v190 = vmul.f32 %v189, -0.00019511016
    %v191 = vadd.f32 %v190, 0.008332121
    %v192 = vmul.f32 %v189, %v191
    %v193 = vadd.f32 %v192, -0.16666654
    %v194 = vmul.f32 %v189, %v193
    %v195 = vadd.f32 %v194, 1.0
    %v196 = vmul.f32 %v195, %v180
    %vm197 = vweird.f32 %v53
    %v198 = vadd.s32 %v181, 3
    %v199 = vand.u32 %v198, 3
    %vm200 = vcmp.lt.s32.totalorder %v199, 2
    %vm201 = vcmp.eq.s32.totalorder %v199, 0
    %v202 = vxor.u32 %v196, 2147483648
    %v203 = vsel %vm201, %v188, %v202
    %vm204 = vcmp.eq.s32.totalorder %v199, 2
    %v205 = vxor.u32 %v188, 2147483648
    %v206 = vsel %vm204, %v205, %v196
    %v207 = vsel %vm200, %v203, %v206
    %v208 = vsel %vm197, nan, %v207
    %209 = vst [vmem:[#allocation7] sm:$0xff] %v208
    // Predicated region
    $region22: #{tpu_custom_call.1} parent=1 // pred_check
      _
    $region23: #{tpu_custom_call.1} parent=1 // pred_check_branch
      %211 = sbr.rel (0) target = $region25
    $region24: #{tpu_custom_call.1} parent=1 // pred_region
      %213 = vsyncadd [#allocation4], 0
      %s215 = sshll.u32 [#allocation7], 4
      %s216 = int_to_ptr.vmem [resolvable:$true] %s215
      %s217 = sshll.u32 %s3, 4
      %s218 = int_to_ptr.hbm [resolvable:$true] %s217
      %220 = dma.vmem_to_hbm [thread:$0]  %s216, 128, %s218, [#allocation4]
    $region25: #{tpu_custom_call.1} parent=1 // pred_fallthru
      _
    // Predicated region
    $region26: #{tpu_custom_call.1} parent=1 // pred_check
      _
    $region27: #{tpu_custom_call.1} parent=1 // pred_check_branch
      %222 = sbr.rel (0) target = $region29
    $region28: #{tpu_custom_call.1} parent=1 // pred_region
      %224 = dma.done [#allocation4], 128
    $region29: #{tpu_custom_call.1} parent=1 // pred_fallthru
      _
    %225 = vsyncpa [#allocation3], 1
    %226 = vsyncpa [#allocation6], 1
    %227 = vsyncpa [#allocation4], 1

</llo_original>
